<compile_context>
chip_gen: v7x
topology: tpu7x:2x2x1
jax: 0.10.0
libtpu: 0.0.40
codegen_flags: <defaults>
</compile_context>

<pallas_src>
import jax
import jax.numpy as jnp
from jax import lax
from jax.experimental import pallas as pl
from jax.experimental.pallas import tpu as pltpu


def linear_kernel(x_ref, w_ref, b_ref, o_ref, acc_ref):
    # x_ref: (tm, tk), w_ref: (tn, tk)  (PyTorch layout, contracted in-kernel)
    # b_ref: (1, tn),  o_ref: (tm, tn), acc_ref: (tm, tn) f32 scratch
    k = pl.program_id(2)

    @pl.when(k == 0)
    def _():
        acc_ref[...] = jnp.zeros_like(acc_ref)

    # Contract X's dim 1 against W's dim 1  ==  X @ W.T, f32 accumulation on MXU.
    acc_ref[...] += lax.dot_general(
        x_ref[...], w_ref[...],
        dimension_numbers=(((1,), (1,)), ((), ())),
        preferred_element_type=jnp.float32,
    )

    @pl.when(k == pl.num_programs(2) - 1)
    def _():
        # Bias added exactly once, in the finalize branch.
        o_ref[...] = (acc_ref[...] + b_ref[...]).astype(o_ref.dtype)


def _pick_tile(dim, pref):
    # Preferred MXU-aligned tile if it evenly divides the dim; otherwise the
    # full dimension (block == full array is always legal w.r.t. (8,128)).
    if dim <= pref or dim % pref != 0:
        return dim
    return pref


def linear_forward(x, w, b, *, tm=256, tn=256, tk=512):
    """nn.Linear forward: y = x @ w.T + b.

    x: (B, D_in) f32, w: (D_out, D_in) f32 (PyTorch layout, NOT pre-transposed),
    b: (D_out,) f32  ->  (B, D_out) f32
    """
    B, D_in = x.shape
    D_out, _ = w.shape
    b2 = b.reshape(1, D_out)  # cheap glue; bias stays 2-D for TPU layout

    tm = _pick_tile(B, tm)
    tn = _pick_tile(D_out, tn)
    tk = _pick_tile(D_in, tk)
    grid = (B // tm, D_out // tn, D_in // tk)

    cost = pl.CostEstimate(
        flops=2 * B * D_in * D_out,
        transcendentals=0,
        bytes_accessed=4 * (B * D_in + D_out * D_in + B * D_out + D_out),
    )

    return pl.pallas_call(
        linear_kernel,
        out_shape=jax.ShapeDtypeStruct((B, D_out), x.dtype),
        grid_spec=pltpu.PrefetchScalarGridSpec(
            num_scalar_prefetch=0,
            grid=grid,
            in_specs=[
                pl.BlockSpec((tm, tk), lambda i, j, k: (i, k)),  # X tile
                pl.BlockSpec((tn, tk), lambda i, j, k: (j, k)),  # W tile (no transpose)
                pl.BlockSpec((1, tn), lambda i, j, k: (0, j)),   # bias tile (D_out axis only)
            ],
            out_specs=pl.BlockSpec((tm, tn), lambda i, j, k: (i, j)),
            scratch_shapes=[pltpu.VMEM((tm, tn), jnp.float32)],
        ),
        compiler_params=pltpu.CompilerParams(
            dimension_semantics=("parallel", "parallel", "arbitrary"),
            vmem_limit_bytes=32 * 1024 * 1024,
        ),
        cost_estimate=cost,
    )(x, w, b2)


if __name__ == "__main__":
    # --- Spec shapes from the PyTorch script: input_dim=1, output_dim=1, batch=4 ---
    input_dim, output_dim = 1, 1
    X = jnp.array([[1.0], [2.0], [3.0], [4.0]], dtype=jnp.float32)

    key = jax.random.PRNGKey(0)
    kw, kb, kx2, kw2, kb2 = jax.random.split(key, 5)
    bound = 1.0 / (input_dim ** 0.5)
    W = jax.random.uniform(kw, (output_dim, input_dim), jnp.float32, -bound, bound)
    b = jax.random.uniform(kb, (output_dim,), jnp.float32, -bound, bound)

    out = linear_forward(X, W, b)
    jax.block_until_ready(out)
    ref = X @ W.T + b
    assert jnp.allclose(out, ref, atol=1e-6), (out, ref)

    # --- Larger shapes to exercise the tiled grid / pipeline / K-reduction ---
    B2, Din2, Dout2 = 512, 1024, 512  # -> grid (2, 2, 2) with 256/256/512 tiles
    X2 = jax.random.normal(kx2, (B2, Din2), jnp.float32)
    W2 = jax.random.normal(kw2, (Dout2, Din2), jnp.float32) * 0.02
    bb2 = jax.random.normal(kb2, (Dout2,), jnp.float32)

    out2 = linear_forward(X2, W2, bb2)
    jax.block_until_ready(out2)
    ref2 = X2 @ W2.T + bb2
    assert jnp.allclose(out2, ref2, atol=1e-3, rtol=1e-3), "tiled linear mismatch"

    print("KERNEL_OK")
</pallas_src>

<mosaic_0001>
module attributes {stable_mosaic.version = 11 : i64} {
  func.func @linear_kernel(%arg0: i32, %arg1: i32, %arg2: i32, %arg3: memref<4x1xf32, #tpu.memory_space<vmem>>, %arg4: memref<1x1xf32, #tpu.memory_space<vmem>>, %arg5: memref<1x1xf32, #tpu.memory_space<vmem>>, %arg6: memref<4x1xf32, #tpu.memory_space<vmem>>, %arg7: memref<4x1xf32, #tpu.memory_space<vmem>>) attributes {dimension_semantics = [#tpu.dimension_semantics<parallel>, #tpu.dimension_semantics<parallel>, #tpu.dimension_semantics<arbitrary>], iteration_bounds = array<i64: 1, 1, 1>, scalar_prefetch = 0 : i64, scratch_operands = 1 : i64, tpu.core_type = #tpu.core_type<tc>, window_params = [{transform_indices = @transform_0, window_bounds = array<i64: 4, 1>}, {transform_indices = @transform_1, window_bounds = array<i64: 1, 1>}, {transform_indices = @transform_2, window_bounds = array<i64: 1, 1>}, {transform_indices = @transform_3, window_bounds = array<i64: 4, 1>}]} {
    %c0_i32 = arith.constant 0 : i32
    %0 = arith.cmpi eq, %arg2, %c0_i32 : i32
    %1 = arith.extui %0 : i1 to i32
    %c0_i32_0 = arith.constant 0 : i32
    %2 = arith.cmpi ne, %1, %c0_i32_0 : i32
    scf.if %2 {
      %cst_10 = arith.constant 0.000000e+00 : f32
      %12 = vector.broadcast %cst_10 : f32 to vector<4x1xf32>
      %c0_11 = arith.constant 0 : index
      %c0_12 = arith.constant 0 : index
      %13 = vector.load %arg7[%c0_11, %c0_12] : memref<4x1xf32, #tpu.memory_space<vmem>>, vector<4x1xf32>
      tpu.vector_store %arg7[%c0_11, %c0_12], %12 {strides = array<i32>} : memref<4x1xf32, #tpu.memory_space<vmem>>, vector<4x1xf32>,
    } else {
    }
    %c0 = arith.constant 0 : index
    %c0_1 = arith.constant 0 : index
    %3 = vector.load %arg7[%c0, %c0_1] : memref<4x1xf32, #tpu.memory_space<vmem>>, vector<4x1xf32>
    %c0_2 = arith.constant 0 : index
    %c0_3 = arith.constant 0 : index
    %4 = vector.load %arg3[%c0_2, %c0_3] : memref<4x1xf32, #tpu.memory_space<vmem>>, vector<4x1xf32>
    %c0_4 = arith.constant 0 : index
    %c0_5 = arith.constant 0 : index
    %5 = vector.load %arg4[%c0_4, %c0_5] : memref<1x1xf32, #tpu.memory_space<vmem>>, vector<1x1xf32>
    %cst = arith.constant dense<0.000000e+00> : vector<4x1xf32>
    %6 = tpu.matmul %4, %5, %cst {dimension_numbers = #tpu.dot_dimension_numbers<[1], [1], [0], [0], [0, 0, 1, 0], [], []>} : vector<4x1xf32>, vector<1x1xf32>, vector<4x1xf32> -> vector<4x1xf32>
    %7 = arith.addf %3, %6 : vector<4x1xf32>
    %c0_6 = arith.constant 0 : index
    %c0_7 = arith.constant 0 : index
    %8 = vector.load %arg7[%c0_6, %c0_7] : memref<4x1xf32, #tpu.memory_space<vmem>>, vector<4x1xf32>
    tpu.vector_store %arg7[%c0_6, %c0_7], %7 {strides = array<i32>} : memref<4x1xf32, #tpu.memory_space<vmem>>, vector<4x1xf32>,
    %c0_i32_8 = arith.constant 0 : i32
    %9 = arith.cmpi eq, %arg2, %c0_i32_8 : i32
    %10 = arith.extui %9 : i1 to i32
    %c0_i32_9 = arith.constant 0 : i32
    %11 = arith.cmpi ne, %10, %c0_i32_9 : i32
    scf.if %11 {
      %c0_10 = arith.constant 0 : index
      %c0_11 = arith.constant 0 : index
      %12 = vector.load %arg7[%c0_10, %c0_11] : memref<4x1xf32, #tpu.memory_space<vmem>>, vector<4x1xf32>
      %c0_12 = arith.constant 0 : index
      %c0_13 = arith.constant 0 : index
      %13 = vector.load %arg5[%c0_12, %c0_13] : memref<1x1xf32, #tpu.memory_space<vmem>>, vector<1x1xf32>
      %14 = vector.broadcast %13 : vector<1x1xf32> to vector<4x1xf32>
      %15 = arith.addf %12, %14 : vector<4x1xf32>
      %c0_14 = arith.constant 0 : index
      %c0_15 = arith.constant 0 : index
      %16 = vector.load %arg6[%c0_14, %c0_15] : memref<4x1xf32, #tpu.memory_space<vmem>>, vector<4x1xf32>
      tpu.vector_store %arg6[%c0_14, %c0_15], %15 {strides = array<i32>} : memref<4x1xf32, #tpu.memory_space<vmem>>, vector<4x1xf32>,
    } else {
    }
    return
  }
  func.func @transform_0(%arg0: i32, %arg1: i32, %arg2: i32) -> (i32, i32) {
    %c0_i32 = arith.constant 0 : i32
    return %arg0, %arg2 : i32, i32
  }
  func.func @transform_1(%arg0: i32, %arg1: i32, %arg2: i32) -> (i32, i32) {
    %c0_i32 = arith.constant 0 : i32
    return %arg1, %arg2 : i32, i32
  }
  func.func @transform_2(%arg0: i32, %arg1: i32, %arg2: i32) -> (i32, i32) {
    %c0_i32 = arith.constant 0 : i32
    %c0_i32_0 = arith.constant 0 : i32
    return %c0_i32, %arg1 : i32, i32
  }
  func.func @transform_3(%arg0: i32, %arg1: i32, %arg2: i32) -> (i32, i32) {
    %c0_i32 = arith.constant 0 : i32
    return %arg0, %arg1 : i32, i32
  }
}

</mosaic_0001>

<llo_original>
// kernel: tpu_custom_call.1
$region0: #{tpu_custom_call.1}
  #allocation0 [shape = 'u32[]', space=smem, size = 0x4, offset = 0x4, fixed_abs, tag = 'smem constant byte address 0x4 - core index']
  #allocation1 [shape = 'u32[144,128]{1,0:T(1,128)}', space=vmem, size = 0x12000, scoped, tag = 'internal scratch']
  #allocation2 [shape = 'f32[4,1]{1,0:T(4,128)}', space=vmem, size = 0x800, scoped, tag = 'scratch operand']
  #allocation3 [shape = 'f32[1,1]{1,0:T(1,128)S(1)}', space=vmem, size = 0x200, scoped, tag = 'scoped memory for tpu_custom_call.1']
  #allocation4 [shape = 'f32[1,1]{1,0:T(1,128)S(1)}', space=vmem, size = 0x200, scoped, tag = 'scoped memory for tpu_custom_call.1']
  %s0 = inlined_call_operand.vmem [shape: f32[4,1], index: 0, kind: input, shape index: {}]
  %s1 = inlined_call_operand.<no memory space> [shape: f32[1,1], index: 1, kind: input, shape index: {}]
  %s2 = inlined_call_operand.<no memory space> [shape: f32[1,1], index: 2, kind: input, shape index: {}]
  %s3 = inlined_call_operand.vmem [shape: f32[4,1], index: 3, kind: output, shape index: {}]
  %s4 = sld [smem:[#allocation0]]
  $region30: #{tpu_custom_call.1} parent=0
    _
  %s6 = ssub.s32 1, %s4
  %s7 = scalar_select 0, %s6, %s4
  %v8 = vstv %s1
  %9 = vst [vmem:[#allocation3] sm:$0x1] %v8
  %v10 = vstv %s2
  %11 = vst [vmem:[#allocation4] sm:$0x1] %v10
  // Predicated region
  $region2: #{tpu_custom_call.1} parent=0 // pred_check
    _
  $region3: #{tpu_custom_call.1} parent=0 // pred_check_branch
    %13 = sbr.rel (0) target = $region5
  $region4: #{tpu_custom_call.1} parent=0 // pred_region
    _
  $region5: #{tpu_custom_call.1} parent=0 // pred_fallthru
    _
  // Predicated region
  $region6: #{tpu_custom_call.1} parent=0 // pred_check
    _
  $region7: #{tpu_custom_call.1} parent=0 // pred_check_branch
    %15 = sbr.rel (0) target = $region9
  $region8: #{tpu_custom_call.1} parent=0 // pred_region
    _
  $region9: #{tpu_custom_call.1} parent=0 // pred_fallthru
    _
  // Predicated region
  $region10: #{tpu_custom_call.1} parent=0 // pred_check
    _
  $region11: #{tpu_custom_call.1} parent=0 // pred_check_branch
    %17 = sbr.rel (0) target = $region13
  $region12: #{tpu_custom_call.1} parent=0 // pred_region
    _
  $region13: #{tpu_custom_call.1} parent=0 // pred_fallthru
    _
  %p18 = scmp.eq.s32.totalorder 0, 0
  // Predicated region
  $region14: #{tpu_custom_call.1} parent=0 // pred_check
    %p19 = pneg %p18
  $region15: #{tpu_custom_call.1} parent=0 // pred_check_branch
    %21 = sbr.rel (%p19) target = $region17
  $region16: #{tpu_custom_call.1} parent=0 // pred_region
    %vm22 = vcmask 3072
    %23 = vst.msk [vmem:[#allocation2] sm:$0xf] %vm22, 0.0
  $region17: #{tpu_custom_call.1} parent=0 // pred_fallthru
    _
  %v24 = vld [vmem:[#allocation2] sm:$0xf]
  %v25 = vld [vmem:[%s0] sm:$0xf]
  %v26 = vld [vmem:[#allocation3] sm:$0x1]
  %v28 = vlaneseq
  %v29 = vshrl.u32 %v28, 7
  %v30 = vsub.s32 0, %v29
  %v31 = vrot.slane %v26, %v30
  %v33 = vmul.f32 %v25, %v31
  %v34 = vadd.f32 %v33, 0.0
  %v35 = vadd.f32 %v24, %v34
  %vm36 = vcmask 3072
  %37 = vst.msk [vmem:[#allocation2] sm:$0xf] %vm36, %v35
  // Predicated region
  $region18: #{tpu_custom_call.1} parent=0 // pred_check
    %p38 = pneg %p18
  $region19: #{tpu_custom_call.1} parent=0 // pred_check_branch
    %40 = sbr.rel (%p38) target = $region21
  $region20: #{tpu_custom_call.1} parent=0 // pred_region
    %v41 = vld [vmem:[#allocation2] sm:$0xf]
    %v42 = vld [vmem:[#allocation4] sm:$0x1]
    %v44 = vlaneseq
    %v45 = vshrl.u32 %v44, 7
    %v46 = vsub.s32 0, %v45
    %v47 = vrot.slane %v42, %v46
    %v49 = vadd.f32 %v41, %v47
    %50 = vst.msk [vmem:[%s3] sm:$0xf] %vm36, %v49
  $region21: #{tpu_custom_call.1} parent=0 // pred_fallthru
    _
  // Predicated region
  $region22: #{tpu_custom_call.1} parent=0 // pred_check
    _
  $region23: #{tpu_custom_call.1} parent=0 // pred_check_branch
    %52 = sbr.rel (0) target = $region25
  $region24: #{tpu_custom_call.1} parent=0 // pred_region
    _
  $region25: #{tpu_custom_call.1} parent=0 // pred_fallthru
    _
  // Predicated region
  $region26: #{tpu_custom_call.1} parent=0 // pred_check
    _
  $region27: #{tpu_custom_call.1} parent=0 // pred_check_branch
    %54 = sbr.rel (0) target = $region29
  $region28: #{tpu_custom_call.1} parent=0 // pred_region
    _
  $region29: #{tpu_custom_call.1} parent=0 // pred_fallthru
    _

</llo_original>
